<compile_context>
chip_gen: v7x
topology: tpu7x:2x2x1
jax: 0.10.0
libtpu: 0.0.40
codegen_flags: <defaults>
</compile_context>

<pallas_src>
import functools

import jax
import jax.numpy as jnp
from jax import lax
from jax.experimental import pallas as pl
from jax.experimental.pallas import tpu as pltpu

LANES = 128
SUBLANES = 8
ALIGN = SUBLANES * LANES        # 1024-element alignment of the kernel's main slab
ACC_ROWS_WIDE = 64              # wide accumulator -> 8 independent f32 add chains
_MIB = 1024 * 1024


def _detect_tpu():
    """Best-effort (vmem_capacity_bytes, tensorcores_per_chip) with safe fallbacks."""
    vmem_bytes = 128 * _MIB
    num_tc = 1
    try:
        info = pltpu.get_tpu_info()
        v = getattr(info, "vmem_capacity_bytes", None)
        if v:
            vmem_bytes = int(v)
        for name in ("num_tensorcores", "tensorcore_count", "num_cores", "core_count"):
            c = getattr(info, name, None)
            if c:
                num_tc = int(c)
                break
    except Exception:
        # Detection is purely a perf knob; conservative defaults are always safe.
        pass
    # v7x heuristic: 64 MiB VMEM per TensorCore, two TensorCores per chip.
    if num_tc == 1 and vmem_bytes <= 64 * _MIB:
        num_tc = 2
    return vmem_bytes, num_tc


def _mse_partial_kernel(x_ref, y_ref, out_ref, acc_ref, *,
                        row_tile, acc_rows, tiles_per_shard, rows_valid):
    c = pl.program_id(0)   # shard (TensorCore on v7x)
    i = pl.program_id(1)   # tile within shard (reduction axis)

    @pl.when(i == 0)
    def _():
        acc_ref[...] = jnp.zeros_like(acc_ref)

    # Native-dtype DMA; upcast on-chip (halves HBM traffic for bf16 inputs).
    d = x_ref[...].astype(jnp.float32) - y_ref[...].astype(jnp.float32)
    dsq = d * d

    # Unclamped logical position of this tile in the row space.
    logical_tile = c * tiles_per_shard + i
    base_row = logical_tile * row_tile
    is_full = (base_row + row_tile) <= rows_valid

    @pl.when(is_full)
    def _():
        # Common case: no masking work at all; accumulate into a wide
        # (acc_rows, 128) slab so adds form many independent chains.
        acc_ref[...] += jnp.sum(
            dsq.reshape(row_tile // acc_rows, acc_rows, LANES), axis=0)

    @pl.when(jnp.logical_not(is_full))
    def _():
        # Partial last tile of the row space, or a shard-padding tile whose
        # index_map was clamped: rows at/past rows_valid contribute zero.
        row_ids = base_row + lax.broadcasted_iota(jnp.int32, (row_tile, 1), 0)
        masked = jnp.where(row_ids < rows_valid, dsq, 0.0)
        acc_ref[...] += jnp.sum(
            masked.reshape(row_tile // acc_rows, acc_rows, LANES), axis=0)

    @pl.when(i == pl.num_programs(1) - 1)
    def _():
        out_ref[...] = acc_ref[...].reshape(1, acc_rows, LANES)


def polymorphic_mse_loss(x, y, _=None, *, max_rows_per_tile=None):
    """JAX/Pallas equivalent of PolymorphicMSE_loss.forward(x, y, _)."""
    assert x.shape == y.shape, "mse_loss with default args requires same shape"
    if x.dtype != y.dtype:
        ct = jnp.result_type(x.dtype, y.dtype)
        x = x.astype(ct)
        y = y.astype(ct)

    n_elem = x.size
    if n_elem == 0:
        # torch.nn.functional.mse_loss on empty inputs yields nan.
        return jnp.float32(jnp.nan)

    xf = x.reshape(-1)
    yf = y.reshape(-1)

    # Main slab = the largest 1024-aligned prefix: a free metadata reshape to
    # (rows, 128) with rows a multiple of 8.  The < 1024-element tail is
    # folded in with a tiny jnp sum below (no full-array pad copies).
    n_main = (n_elem // ALIGN) * ALIGN
    n_tail = n_elem - n_main

    total = jnp.zeros((), jnp.float32)

    if n_main > 0:
        rows_main = n_main // LANES
        if n_main == n_elem:
            x2 = xf.reshape(rows_main, LANES)
            y2 = yf.reshape(rows_main, LANES)
        else:
            x2 = xf[:n_main].reshape(rows_main, LANES)
            y2 = yf[:n_main].reshape(rows_main, LANES)

        itemsize = jnp.dtype(x2.dtype).itemsize
        vmem_physical, num_tc = _detect_tpu()

        # v7x (2 TCs, 64 MiB VMEM, ~3.2 TB/s HBM): 3-deep input buffering to
        # hide DMA-issue latency; single-TC chips keep double buffering.
        buffer_depth = 3 if num_tc >= 2 else 2

        # Budget <= 32 MiB (and <= half of physical VMEM) for the resident
        # input buffers: 2 inputs x buffer_depth x row_tile x 128 x itemsize.
        budget = max(4 * _MIB, min(32 * _MIB, vmem_physical // 2))
        rows_budget = max(SUBLANES, budget // (2 * buffer_depth * LANES * itemsize))
        if max_rows_per_tile is not None:
            rows_budget = min(rows_budget, max(SUBLANES, int(max_rows_per_tile)))
        row_tile = min(rows_main, rows_budget)
        if row_tile < rows_main:
            align = 512 if row_tile >= 512 else SUBLANES
            row_tile = (row_tile // align) * align
        acc_rows = ACC_ROWS_WIDE if row_tile % ACC_ROWS_WIDE == 0 else SUBLANES

        tiles_total = pl.cdiv(rows_main, row_tile)
        # Only pay for the shard axis where there are actually two TensorCores.
        num_shards = 2 if (num_tc >= 2 and tiles_total >= 2) else 1
        tiles_per_shard = pl.cdiv(tiles_total, num_shards)
        grid = (num_shards, tiles_per_shard)

        if num_shards == 1:
            def block_index(c, i):
                return (i, 0)
        else:
            def block_index(c, i):
                # Clamp shard-padding tiles to the last valid block; the
                # in-kernel row mask zeroes their contribution.
                return (jnp.minimum(c * tiles_per_shard + i, tiles_total - 1), 0)

        kernel = functools.partial(
            _mse_partial_kernel,
            row_tile=row_tile,
            acc_rows=acc_rows,
            tiles_per_shard=tiles_per_shard,
            rows_valid=rows_main,
        )

        # Explicit scoped-VMEM limit: resident buffers + ~16 MiB headroom,
        # clamped below physical VMEM (works for v5e/v6e 128 MiB and v7x 64 MiB).
        resident = 2 * buffer_depth * row_tile * LANES * itemsize
        resident += (num_shards + 1) * acc_rows * LANES * 4 * 2
        vmem_limit = int(max(16 * _MIB,
                             min(vmem_physical - 8 * _MIB, resident + 16 * _MIB)))

        spec_kwargs = {}
        if buffer_depth != 2:
            spec_kwargs["pipeline_mode"] = pl.Buffered(buffer_depth)
        in_spec = pl.BlockSpec((row_tile, LANES), block_index, **spec_kwargs)

        cost = pl.CostEstimate(
            flops=3 * n_main,
            transcendentals=0,
            bytes_accessed=2 * n_main * itemsize + num_shards * acc_rows * LANES * 4,
        )

        partials = pl.pallas_call(
            kernel,
            out_shape=jax.ShapeDtypeStruct((num_shards, acc_rows, LANES), jnp.float32),
            grid_spec=pltpu.PrefetchScalarGridSpec(
                num_scalar_prefetch=0,
                grid=grid,
                in_specs=[in_spec, in_spec],
                out_specs=pl.BlockSpec((1, acc_rows, LANES), lambda c, i: (c, 0, 0)),
                scratch_shapes=[pltpu.VMEM((acc_rows, LANES), jnp.float32)],
            ),
            compiler_params=pltpu.CompilerParams(
                dimension_semantics=("parallel", "arbitrary"),
                vmem_limit_bytes=vmem_limit,
            ),
            cost_estimate=cost,
        )(x2, y2)

        total = total + jnp.sum(partials)

    if n_tail > 0:
        # TODO(synk): if ragged shapes dominate a workload, replace this with an
        # in-kernel manual DMA of the tail (memory_space=pl.ANY) to avoid the
        # prefix-slice copy of the main part above.
        dt = xf[n_main:].astype(jnp.float32) - yf[n_main:].astype(jnp.float32)
        total = total + jnp.sum(dt * dt)

    # Note: torch returns the input dtype for bf16/fp16 inputs; we keep the
    # numerically safer f32 accumulation/result (same reduction semantics).
    return (total / jnp.float32(n_elem)).astype(jnp.float32)


if __name__ == "__main__":
    ignored = jnp.zeros((1,), dtype=jnp.float32)  # third arg is ignored

    def ref_mse(a, b):
        af = a.astype(jnp.float32)
        bf = b.astype(jnp.float32)
        return jnp.mean((af - bf) ** 2)

    # 1) Aligned f32 case (kernel path, single full tile).
    k1, k2 = jax.random.split(jax.random.PRNGKey(0))
    shape = (2, 4, 16, 16)  # 2048 elements
    x = jax.random.normal(k1, shape, dtype=jnp.float32)
    y = jax.random.normal(k2, shape, dtype=jnp.float32)
    out = polymorphic_mse_loss(x, y, ignored)
    jax.block_until_ready(out)
    assert jnp.allclose(out, ref_mse(x, y), rtol=1e-5, atol=1e-6), (out, ref_mse(x, y))

    # 2) Ragged: kernel on the 1024-aligned prefix + wrapper tail sum.
    k3, k4 = jax.random.split(jax.random.PRNGKey(1))
    x2 = jax.random.normal(k3, (3, 5, 7, 11), dtype=jnp.float32)  # 1155 elements
    y2 = jax.random.normal(k4, (3, 5, 7, 11), dtype=jnp.float32)
    out2 = polymorphic_mse_loss(x2, y2, ignored)
    jax.block_until_ready(out2)
    assert jnp.allclose(out2, ref_mse(x2, y2), rtol=1e-5, atol=1e-6), (out2, ref_mse(x2, y2))

    # 3) Tiny (< 1024 elements): pure-jnp fallback path.
    k5, k6 = jax.random.split(jax.random.PRNGKey(2))
    x3 = jax.random.normal(k5, (2, 3, 5, 32), dtype=jnp.float32)  # 960 elements
    y3 = jax.random.normal(k6, (2, 3, 5, 32), dtype=jnp.float32)
    out3 = polymorphic_mse_loss(x3, y3, ignored)
    jax.block_until_ready(out3)
    assert jnp.allclose(out3, ref_mse(x3, y3), rtol=1e-5, atol=1e-6), (out3, ref_mse(x3, y3))

    # 4) Multi-tile with a partial (masked) last block + tail: force small tiles.
    k7, k8 = jax.random.split(jax.random.PRNGKey(3))
    x4 = jax.random.normal(k7, (2, 4, 1165), dtype=jnp.float32)  # 9320 elements
    y4 = jax.random.normal(k8, (2, 4, 1165), dtype=jnp.float32)
    out4 = polymorphic_mse_loss(x4, y4, ignored, max_rows_per_tile=64)
    jax.block_until_ready(out4)
    assert jnp.allclose(out4, ref_mse(x4, y4), rtol=1e-5, atol=1e-6), (out4, ref_mse(x4, y4))

    # 5) bf16 inputs: native-dtype DMA, on-chip f32 upcast/accumulation.
    k9, k10 = jax.random.split(jax.random.PRNGKey(4))
    x5 = jax.random.normal(k9, (2, 8, 32, 32), dtype=jnp.bfloat16)  # 16384 elements
    y5 = jax.random.normal(k10, (2, 8, 32, 32), dtype=jnp.bfloat16)
    out5 = polymorphic_mse_loss(x5, y5, ignored)
    jax.block_until_ready(out5)
    assert jnp.allclose(out5, ref_mse(x5, y5), rtol=1e-4, atol=1e-5), (out5, ref_mse(x5, y5))

    print("KERNEL_OK")
</pallas_src>

<mosaic_0001>
module attributes {stable_mosaic.version = 11 : i64} {
  func.func @_mse_partial_kernel(%arg0: i32, %arg1: i32, %arg2: memref<16x128xf32, #tpu.memory_space<vmem>>, %arg3: memref<16x128xf32, #tpu.memory_space<vmem>>, %arg4: memref<1x8x128xf32, #tpu.memory_space<vmem>>, %arg5: memref<8x128xf32, #tpu.memory_space<vmem>>) attributes {dimension_semantics = [#tpu.dimension_semantics<parallel>, #tpu.dimension_semantics<arbitrary>], iteration_bounds = array<i64: 1, 1>, scalar_prefetch = 0 : i64, scratch_operands = 1 : i64, tpu.core_type = #tpu.core_type<tc>, window_params = [{transform_indices = @transform_0, window_bounds = array<i64: 16, 128>}, {transform_indices = @transform_1, window_bounds = array<i64: 16, 128>}, {transform_indices = @transform_2, window_bounds = array<i64: 1, 8, 128>}]} {
    %c0_i32 = arith.constant 0 : i32
    %0 = arith.cmpi eq, %arg1, %c0_i32 : i32
    %1 = arith.extui %0 : i1 to i32
    %c0_i32_0 = arith.constant 0 : i32
    %2 = arith.cmpi ne, %1, %c0_i32_0 : i32
    scf.if %2 {
      %cst = arith.constant 0.000000e+00 : f32
      %20 = vector.broadcast %cst : f32 to vector<8x128xf32>
      %c0_10 = arith.constant 0 : index
      %c0_11 = arith.constant 0 : index
      %21 = vector.load %arg5[%c0_10, %c0_11] : memref<8x128xf32, #tpu.memory_space<vmem>>, vector<8x128xf32>
      tpu.vector_store %arg5[%c0_10, %c0_11], %20 {strides = array<i32>} : memref<8x128xf32, #tpu.memory_space<vmem>>, vector<8x128xf32>,
    } else {
    }
    %c0 = arith.constant 0 : index
    %c0_1 = arith.constant 0 : index
    %3 = vector.load %arg2[%c0, %c0_1] : memref<16x128xf32, #tpu.memory_space<vmem>>, vector<16x128xf32>
    %c0_2 = arith.constant 0 : index
    %c0_3 = arith.constant 0 : index
    %4 = vector.load %arg3[%c0_2, %c0_3] : memref<16x128xf32, #tpu.memory_space<vmem>>, vector<16x128xf32>
    %5 = arith.subf %3, %4 : vector<16x128xf32>
    %6 = arith.mulf %5, %5 : vector<16x128xf32>
    %c1_i32 = arith.constant 1 : i32
    %7 = arith.muli %arg0, %c1_i32 : i32
    %8 = arith.addi %7, %arg1 : i32
    %c16_i32 = arith.constant 16 : i32
    %9 = arith.muli %8, %c16_i32 : i32
    %c16_i32_4 = arith.constant 16 : i32
    %10 = arith.addi %9, %c16_i32_4 : i32
    %c16_i32_5 = arith.constant 16 : i32
    %11 = arith.cmpi sle, %10, %c16_i32_5 : i32
    %12 = arith.extui %11 : i1 to i32
    %c0_i32_6 = arith.constant 0 : i32
    %13 = arith.cmpi ne, %12, %c0_i32_6 : i32
    scf.if %13 {
      %c0_10 = arith.constant 0 : index
      %c0_11 = arith.constant 0 : index
      %20 = vector.load %arg5[%c0_10, %c0_11] : memref<8x128xf32, #tpu.memory_space<vmem>>, vector<8x128xf32>
      %21 = vector.shape_cast %6 : vector<16x128xf32> to vector<2x8x128xf32>
      %cst = arith.constant dense<0.000000e+00> : vector<8x128xf32>
      %22 = vector.multi_reduction <add>, %21, %cst [0] : vector<2x8x128xf32> to vector<8x128xf32>
      %23 = arith.addf %20, %22 : vector<8x128xf32>
      %c0_12 = arith.constant 0 : index
      %c0_13 = arith.constant 0 : index
      %24 = vector.load %arg5[%c0_12, %c0_13] : memref<8x128xf32, #tpu.memory_space<vmem>>, vector<8x128xf32>
      tpu.vector_store %arg5[%c0_12, %c0_13], %23 {strides = array<i32>} : memref<8x128xf32, #tpu.memory_space<vmem>>, vector<8x128xf32>,
    } else {
    }
    %true = arith.constant true
    %14 = arith.xori %11, %true : i1
    %15 = arith.extui %14 : i1 to i32
    %c0_i32_7 = arith.constant 0 : i32
    %16 = arith.cmpi ne, %15, %c0_i32_7 : i32
    scf.if %16 {
      %20 = tpu.iota {dimensions = array<i32: 0>} : vector<16x1xi32>
      %21 = vector.broadcast %9 : i32 to vector<16x1xi32>
      %22 = arith.addi %21, %20 : vector<16x1xi32>
      %c16_i32_10 = arith.constant 16 : i32
      %23 = vector.broadcast %c16_i32_10 : i32 to vector<16x1xi32>
      %24 = arith.cmpi slt, %22, %23 : vector<16x1xi32>
      %cst = arith.constant 0.000000e+00 : f32
      %25 = vector.shape_cast %24 : vector<16x1xi1> to vector<16x1xi1>
      %26 = vector.broadcast %25 : vector<16x1xi1> to vector<16x128xi1>
      %27 = vector.broadcast %cst : f32 to vector<16x128xf32>
      %28 = arith.select %26, %6, %27 : vector<16x128xi1>, vector<16x128xf32>
      %c0_11 = arith.constant 0 : index
      %c0_12 = arith.constant 0 : index
      %29 = vector.load %arg5[%c0_11, %c0_12] : memref<8x128xf32, #tpu.memory_space<vmem>>, vector<8x128xf32>
      %30 = vector.shape_cast %28 : vector<16x128xf32> to vector<2x8x128xf32>
      %cst_13 = arith.constant dense<0.000000e+00> : vector<8x128xf32>
      %31 = vector.multi_reduction <add>, %30, %cst_13 [0] : vector<2x8x128xf32> to vector<8x128xf32>
      %32 = arith.addf %29, %31 : vector<8x128xf32>
      %c0_14 = arith.constant 0 : index
      %c0_15 = arith.constant 0 : index
      %33 = vector.load %arg5[%c0_14, %c0_15] : memref<8x128xf32, #tpu.memory_space<vmem>>, vector<8x128xf32>
      tpu.vector_store %arg5[%c0_14, %c0_15], %32 {strides = array<i32>} : memref<8x128xf32, #tpu.memory_space<vmem>>, vector<8x128xf32>,
    } else {
    }
    %c0_i32_8 = arith.constant 0 : i32
    %17 = arith.cmpi eq, %arg1, %c0_i32_8 : i32
    %18 = arith.extui %17 : i1 to i32
    %c0_i32_9 = arith.constant 0 : i32
    %19 = arith.cmpi ne, %18, %c0_i32_9 : i32
    scf.if %19 {
      %c0_10 = arith.constant 0 : index
      %c0_11 = arith.constant 0 : index
      %20 = vector.load %arg5[%c0_10, %c0_11] : memref<8x128xf32, #tpu.memory_space<vmem>>, vector<8x128xf32>
      %21 = vector.shape_cast %20 : vector<8x128xf32> to vector<1x8x128xf32>
      %c0_12 = arith.constant 0 : index
      %c0_13 = arith.constant 0 : index
      %c0_14 = arith.constant 0 : index
      %22 = vector.load %arg4[%c0_12, %c0_13, %c0_14] : memref<1x8x128xf32, #tpu.memory_space<vmem>>, vector<1x8x128xf32>
      tpu.vector_store %arg4[%c0_12, %c0_13, %c0_14], %21 {strides = array<i32>} : memref<1x8x128xf32, #tpu.memory_space<vmem>>, vector<1x8x128xf32>,
    } else {
    }
    return
  }
  func.func @transform_0(%arg0: i32, %arg1: i32) -> (i32, i32) {
    %c0_i32 = arith.constant 0 : i32
    %c0_i32_0 = arith.constant 0 : i32
    return %arg1, %c0_i32 : i32, i32
  }
  func.func @transform_1(%arg0: i32, %arg1: i32) -> (i32, i32) {
    %c0_i32 = arith.constant 0 : i32
    %c0_i32_0 = arith.constant 0 : i32
    return %arg1, %c0_i32 : i32, i32
  }
  func.func @transform_2(%arg0: i32, %arg1: i32) -> (i32, i32, i32) {
    %c0_i32 = arith.constant 0 : i32
    %c0_i32_0 = arith.constant 0 : i32
    %c0_i32_1 = arith.constant 0 : i32
    return %arg0, %c0_i32, %c0_i32_0 : i32, i32, i32
  }
}

</mosaic_0001>

<llo_original>
// kernel: tpu_custom_call.1
$region0: #{tpu_custom_call.1}
  #allocation0 [shape = 'u32[]', space=smem, size = 0x4, offset = 0x4, fixed_abs, tag = 'smem constant byte address 0x4 - core index']
  #allocation1 [shape = 'u32[144,128]{1,0:T(1,128)}', space=vmem, size = 0x12000, scoped, tag = 'internal scratch']
  #allocation2 [shape = 'f32[8,128]{1,0:T(8,128)}', space=vmem, size = 0x1000, scoped, tag = 'scratch operand']
  %s0 = inlined_call_operand.hbm [shape: f32[16,128], index: 0, kind: input, shape index: {}]
  %s1 = inlined_call_operand.hbm [shape: f32[16,128], index: 1, kind: input, shape index: {}]
  %s2 = inlined_call_operand.hbm [shape: f32[1,8,128], index: 2, kind: output, shape index: {}]
  %s3 = sld [smem:[#allocation0]]
  $region42: #{tpu_custom_call.1} parent=0
    _
  %s5 = ssub.s32 1, %s3
  %s6 = scalar_select 0, %s5, %s3
  $region1: #{tpu_custom_call.1} parent=0
    #allocation3 [shape = 'u8[8192]{0}', space=vmem, size = 0x2000, scoped, tag = 'input window, operand 0, single buffered']
    #allocation4 [shape = 's32[1]{0}', space=sflag, size = 0x4, scoped, tag = 'scoped memory for tpu_custom_call.1']
    #allocation5 [shape = 's32[1]{0}', space=sflag, size = 0x4, scoped, tag = 'scoped memory for tpu_custom_call.1']
    #allocation6 [shape = 'u8[8192]{0}', space=vmem, size = 0x2000, scoped, tag = 'input window, operand 1, single buffered']
    #allocation7 [shape = 's32[1]{0}', space=sflag, size = 0x4, scoped, tag = 'scoped memory for tpu_custom_call.1']
    #allocation8 [shape = 'u8[4096]{0}', space=vmem, size = 0x1000, scoped, tag = 'output window, operand 0, single buffered']
    %7 = vsyncpa [#allocation4], 0
    %8 = vsyncpa [#allocation7], 0
    %9 = vsyncpa [#allocation5], 0
    // Predicated region
    $region2: #{tpu_custom_call.1} parent=1 // pred_check
      _
    $region3: #{tpu_custom_call.1} parent=1 // pred_check_branch
      %11 = sbr.rel (0) target = $region5
    $region4: #{tpu_custom_call.1} parent=1 // pred_region
      %s13 = ssub.s32 256, 256
      %14 = vsyncadd [#allocation4], %s13
      %s15 = sshll.u32 [#allocation3], 4
      %s16 = int_to_ptr.vmem [resolvable:$true] %s15
      %21 = dma.hbm_to_vmem [thread:$0]  %s0, 256, %s16, [#allocation4], 128, 128, 8
    $region5: #{tpu_custom_call.1} parent=1 // pred_fallthru
      _
    // Predicated region
    $region6: #{tpu_custom_call.1} parent=1 // pred_check
      _
    $region7: #{tpu_custom_call.1} parent=1 // pred_check_branch
      %23 = sbr.rel (0) target = $region9
    $region8: #{tpu_custom_call.1} parent=1 // pred_region
      %s25 = ssub.s32 256, 256
      %26 = vsyncadd [#allocation7], %s25
      %s27 = sshll.u32 [#allocation6], 4
      %s28 = int_to_ptr.vmem [resolvable:$true] %s27
      %33 = dma.hbm_to_vmem [thread:$0]  %s1, 256, %s28, [#allocation7], 128, 128, 8
    $region9: #{tpu_custom_call.1} parent=1 // pred_fallthru
      _
    // Predicated region
    $region10: #{tpu_custom_call.1} parent=1 // pred_check
      _
    $region11: #{tpu_custom_call.1} parent=1 // pred_check_branch
      %35 = sbr.rel (0) target = $region13
    $region12: #{tpu_custom_call.1} parent=1 // pred_region
      %36 = dma.done [#allocation4], 256
    $region13: #{tpu_custom_call.1} parent=1 // pred_fallthru
      _
    // Predicated region
    $region14: #{tpu_custom_call.1} parent=1 // pred_check
      _
    $region15: #{tpu_custom_call.1} parent=1 // pred_check_branch
      %38 = sbr.rel (0) target = $region17
    $region16: #{tpu_custom_call.1} parent=1 // pred_region
      %39 = dma.done [#allocation7], 256
    $region17: #{tpu_custom_call.1} parent=1 // pred_fallthru
      _
    %p40 = scmp.eq.s32.totalorder 0, 0
    // Predicated region
    $region18: #{tpu_custom_call.1} parent=1 // pred_check
      %p41 = pneg %p40
    $region19: #{tpu_custom_call.1} parent=1 // pred_check_branch
      %43 = sbr.rel (%p41) target = $region21
    $region20: #{tpu_custom_call.1} parent=1 // pred_region
      %44 = vst [vmem:[#allocation2] sm:$0xff] 0.0
    $region21: #{tpu_custom_call.1} parent=1 // pred_fallthru
      _
    %v45 = vld [vmem:[#allocation3] sm:$0xff]
    %v46 = vld [vmem:[#allocation3 + $0x8] sm:$0xff]
    %v47 = vld [vmem:[#allocation6] sm:$0xff]
    %v48 = vld [vmem:[#allocation6 + $0x8] sm:$0xff]
    %v49 = vsub.f32 %v45, %v47
    %v50 = vsub.f32 %v46, %v48
    %v51 = vmul.f32 %v49, %v49
    %v52 = vmul.f32 %v50, %v50
    %s53 = sadd.s32 0, 0
    %s54 = smul.u32 %s53, 16
    %s55 = sadd.s32 %s54, 16
    %p56 = scmp.le.s32.totalorder %s55, 16
    // Predicated region
    $region22: #{tpu_custom_call.1} parent=1 // pred_check
      %p57 = pneg %p56
    $region23: #{tpu_custom_call.1} parent=1 // pred_check_branch
      %59 = sbr.rel (%p57) target = $region25
    $region24: #{tpu_custom_call.1} parent=1 // pred_region
      %v60 = vld [vmem:[#allocation2] sm:$0xff]
      %v61 = vadd.f32 %v51, %v52
      %v62 = vadd.f32 %v60, %v61
      %63 = vst [vmem:[#allocation2] sm:$0xff] %v62
    $region25: #{tpu_custom_call.1} parent=1 // pred_fallthru
      _
    %p64 = scmp.gt.s32.totalorder %s55, 16
    // Predicated region
    $region26: #{tpu_custom_call.1} parent=1 // pred_check
      %p65 = pneg %p64
    $region27: #{tpu_custom_call.1} parent=1 // pred_check_branch
      %67 = sbr.rel (%p65) target = $region29
    $region28: #{tpu_custom_call.1} parent=1 // pred_region
      %v68 = vlaneseq
      %v69 = vshrl.u32 %v68, 7
      %v70 = vadd.s32 %v69, 8
      %v71 = vstv %s54
      %v72 = vadd.s32 %v71, %v69
      %v73 = vadd.s32 %v71, %v70
      %vm74 = vcmp.lt.s32.totalorder %v72, 16
      %vm75 = vcmp.lt.s32.totalorder %v73, 16
      %v76 = vsel %vm74, 1, 0
      %v77 = vsel %vm75, 1, 0
      %vm78 = vcmp.eq.s32.totalorder %v76, 1
      %vm79 = vcmp.eq.s32.totalorder %v77, 1
      %v80 = vsel %vm78, %v51, 0.0
      %v81 = vsel %vm79, %v52, 0.0
      %v82 = vld [vmem:[#allocation2] sm:$0xff]
      %v83 = vadd.f32 %v80, %v81
      %v84 = vadd.f32 %v82, %v83
      %85 = vst [vmem:[#allocation2] sm:$0xff] %v84
    $region29: #{tpu_custom_call.1} parent=1 // pred_fallthru
      _
    // Predicated region
    $region30: #{tpu_custom_call.1} parent=1 // pred_check
      %p86 = pneg %p40
    $region31: #{tpu_custom_call.1} parent=1 // pred_check_branch
      %88 = sbr.rel (%p86) target = $region33
    $region32: #{tpu_custom_call.1} parent=1 // pred_region
      %v89 = vld [vmem:[#allocation2] sm:$0xff]
      %90 = vst [vmem:[#allocation8] sm:$0xff] %v89
    $region33: #{tpu_custom_call.1} parent=1 // pred_fallthru
      _
    // Predicated region
    $region34: #{tpu_custom_call.1} parent=1 // pred_check
      _
    $region35: #{tpu_custom_call.1} parent=1 // pred_check_branch
      %92 = sbr.rel (0) target = $region37
    $region36: #{tpu_custom_call.1} parent=1 // pred_region
      %s94 = ssub.s32 128, 128
      %95 = vsyncadd [#allocation5], %s94
      %s97 = sshll.u32 [#allocation8], 4
      %s98 = int_to_ptr.vmem [resolvable:$true] %s97
      %100 = dma.vmem_to_hbm [thread:$0]  %s98, 128, %s2, [#allocation5]
    $region37: #{tpu_custom_call.1} parent=1 // pred_fallthru
      _
    // Predicated region
    $region38: #{tpu_custom_call.1} parent=1 // pred_check
      _
    $region39: #{tpu_custom_call.1} parent=1 // pred_check_branch
      %102 = sbr.rel (0) target = $region41
    $region40: #{tpu_custom_call.1} parent=1 // pred_region
      %103 = dma.done [#allocation5], 128
    $region41: #{tpu_custom_call.1} parent=1 // pred_fallthru
      _
    %104 = vsyncpa [#allocation4], 1
    %105 = vsyncpa [#allocation7], 1
    %106 = vsyncpa [#allocation5], 1

</llo_original>
